<compile_context>
chip_gen: v6e
topology: v6e:2x2x1
jax: 0.10.0
libtpu: 0.0.40
codegen_flags: <defaults>
</compile_context>

<pallas_src>
import math
import functools

import jax
import jax.numpy as jnp
import numpy as np
from jax.experimental import pallas as pl
from jax.experimental.pallas import tpu as pltpu


def make_params(key, inchannel, outchannel, kernel_size):
    """Deterministic synthetic parameters matching the PyTorch module's shapes."""
    ks = jax.random.split(key, 12)
    f32 = jnp.float32
    p = {
        # conv weights (PyTorch layout: (C_out, C_in, K))
        "w1": jax.random.normal(ks[0], (outchannel, inchannel, kernel_size), f32) * 0.2,
        "w2": jax.random.normal(ks[1], (outchannel, outchannel, kernel_size), f32) * 0.2,
        "ws": jax.random.normal(ks[2], (outchannel, inchannel, 1), f32) * 0.2,
        # BatchNorm1d params (gamma, beta, running_mean, running_var)
        "g1": jax.random.uniform(ks[3], (outchannel,), f32, 0.5, 1.5),
        "b1": jax.random.normal(ks[4], (outchannel,), f32) * 0.1,
        "m1": jax.random.normal(ks[5], (outchannel,), f32) * 0.1,
        "v1": jax.random.uniform(ks[6], (outchannel,), f32, 0.5, 1.5),
        "g2": jax.random.uniform(ks[7], (outchannel,), f32, 0.5, 1.5),
        "b2": jax.random.normal(ks[8], (outchannel,), f32) * 0.1,
        "m2": jax.random.normal(ks[9], (outchannel,), f32) * 0.1,
        "v2": jax.random.uniform(ks[10], (outchannel,), f32, 0.5, 1.5),
        "gs": jnp.ones((outchannel,), f32),
        "bs": jnp.zeros((outchannel,), f32),
        "ms": jax.random.normal(ks[11], (outchannel,), f32) * 0.1,
        "vs": jnp.ones((outchannel,), f32),
    }
    return p


def _fold_bn(gamma, beta, mean, var, eps=1e-5):
    scale = gamma / jnp.sqrt(var + eps)
    shift = beta - mean * scale
    return scale.reshape(-1, 1), shift.reshape(-1, 1)


def residual_block_forward(x, params, *, kernel_size, stride, use_res,
                           compute_dtype=jnp.bfloat16):
    """x: (N, C_in, L) float32.  Returns (N, C_out, L1) float32."""
    N, C_in, L = x.shape
    K = kernel_size
    # Even K would make conv2's "same" padding change the length and break the
    # shortcut shape (same issue exists in the PyTorch module); require odd K.
    assert K % 2 == 1, "kernel_size must be odd"
    pad = K // 2
    L1 = (L + 2 * pad - K) // stride + 1          # conv1 (and overall) output length
    C_out = params["w1"].shape[0]

    # ---- batch blocking: fold B batch elements into the lane axis ------------
    # Lane-dense output is the biggest measured lever; target ~512 lanes / step,
    # but keep Nb >= 2 so the "parallel" grid axis can shard across both v7x TCs,
    # and skip folding entirely when L1 is already a 128-multiple (no un-fold pass).
    LANE_TARGET = 512
    if L1 % 128 == 0 or L1 >= LANE_TARGET:
        B = 1
    else:
        B = max(1, min(N, -(-LANE_TARGET // L1)))
        if N >= 2:
            B = min(B, -(-N // 2))                 # guarantee >= 2 grid steps

    # VMEM budget clamp (conservative, works for 16/32/32 MiB default scoped VMEM).
    w_bytes = 2 * C_out * (K * C_in + K * C_out + C_in) + 8 * C_out

    def step_bytes(b):
        bl = b * L1
        if stride > 1:                             # prebuilt im2col block, bf16
            in_b = (K * C_in) * bl * 2
        else:                                      # raw input block, f32
            in_b = C_in * (b * L) * 4
        io = 2 * (in_b + C_out * bl * 4)           # double-buffered in/out blocks
        vals = (K * C_in + K * C_out + 4 * C_out + 2 * C_in) * bl * 4  # in-kernel values
        return io + vals + w_bytes

    VMEM_BUDGET = 24 << 20
    while B > 1 and step_bytes(B) > VMEM_BUDGET:
        B -= 1

    Nb = -(-N // B)                                # grid steps
    Np = Nb * B
    BL = B * L1

    # ---- plain-JAX parameter folding (done once, outside the kernel) ---------
    s1, b1 = _fold_bn(params["g1"], params["b1"], params["m1"], params["v1"])
    s2, b2 = _fold_bn(params["g2"], params["b2"], params["m2"], params["v2"])
    ss, bs = _fold_bn(params["gs"], params["bs"], params["ms"], params["vs"])

    # Fold BN scales into the conv weights; im2col weight layout (C_out, K*C).
    w1f = (jnp.transpose(params["w1"], (0, 2, 1)).reshape(C_out, K * C_in) * s1
           ).astype(compute_dtype)
    w2f = (jnp.transpose(params["w2"], (0, 2, 1)).reshape(C_out, K * C_out) * s2
           ).astype(compute_dtype)
    wsf = (params["ws"][:, :, 0] * ss).astype(compute_dtype)
    shift2 = b2 + bs if use_res else b2
    shifts = jnp.concatenate([b1, shift2], axis=1)           # (C_out, 2) f32

    # ---- input block layout ---------------------------------------------------
    x_pad = jnp.pad(x, ((0, Np - N), (0, 0), (0, 0)))        # batch padding only
    prebuilt = stride > 1
    if not prebuilt:
        # Raw (unpadded, un-gathered) input, batch folded into lanes: (Nb, C_in, B*L).
        # For B == 1 this is just x itself (no wrapper data movement at all).
        xin = (x_pad.reshape(Nb, B, C_in, L)
                    .transpose(0, 2, 1, 3)
                    .reshape(Nb, C_in, B * L))
        in_rows, in_lanes = C_in, B * L
    else:
        # stride > 1 fallback: wrapper-side im2col (strided gather not expressible
        # as a uniform in-kernel lane shift once batch is folded into lanes).
        xpp = jnp.pad(x_pad, ((0, 0), (0, 0), (pad, pad)))
        win = jnp.arange(K)[:, None] + (jnp.arange(L1) * stride)[None, :]
        p1w = xpp[:, :, win]                                  # (Np, C_in, K, L1)
        p1w = jnp.transpose(p1w, (0, 2, 1, 3)).reshape(Np, K * C_in, L1)
        xin = (p1w.reshape(Nb, B, K * C_in, L1)
                  .transpose(0, 2, 1, 3)
                  .reshape(Nb, K * C_in, BL)
                  .astype(compute_dtype))
        in_rows, in_lanes = K * C_in, BL

    # ---- Pallas kernel: one batch block per grid step -------------------------
    def kernel(*refs):
        if use_res:
            a_ref, w1_ref, w2_ref, ws_ref, sh_ref, o_ref = refs
        else:
            a_ref, w1_ref, w2_ref, sh_ref, o_ref = refs
            ws_ref = None

        # Lane position within each folded batch segment (segment length L1; for
        # the stride==1 input block L == L1 so the same index works for conv1).
        lpos = jax.lax.broadcasted_iota(jnp.int32, (1, BL), 1) % L1

        def conv_taps(a):
            # a: (rows, BL).  Returns (K*rows, BL): K shifted copies, with every
            # lane that would read a conv pad column or cross a batch-segment
            # boundary zeroed by a select (mask, not multiply).
            rows = a.shape[0]
            if pad > 0:
                zp = jnp.zeros((rows, pad), a.dtype)
                ap = jnp.concatenate([zp, a, zp], axis=1)     # (rows, BL + 2*pad)
            else:
                ap = a
            parts = []
            for k in range(K):
                sh = k - pad
                t = jax.lax.slice_in_dim(ap, k, k + BL, axis=1)
                valid = jnp.logical_and(lpos + sh >= 0, lpos + sh < L1)
                parts.append(jnp.where(valid, t, 0.0))
            return jnp.concatenate(parts, axis=0)

        if prebuilt:
            p1 = a_ref[...]                                   # (K*C_in, BL) bf16
            # 1x1 shortcut reuses the center-tap rows (exactly x[:, :, ::stride]).
            xs = p1[pad * C_in:(pad + 1) * C_in, :]
        else:
            xb = a_ref[...]                                   # (C_in, BL) f32
            p1 = conv_taps(xb).astype(compute_dtype)          # (K*C_in, BL)
            xs = xb.astype(compute_dtype)                     # shortcut input (stride 1)

        # conv1 + BN1 (scale folded into weights) + shift + tanh: one GEMM.
        h1 = jnp.dot(w1_ref[...], p1, preferred_element_type=jnp.float32)
        h1 = jnp.tanh(h1 + sh_ref[:, 0:1])                    # (C_out, BL) f32

        # conv2: K lane-shifted, boundary-masked taps of h1, one GEMM.
        p2 = conv_taps(h1).astype(compute_dtype)              # (K*C_out, BL)
        out = jnp.dot(w2_ref[...], p2, preferred_element_type=jnp.float32)

        if use_res:
            out = out + jnp.dot(ws_ref[...], xs, preferred_element_type=jnp.float32)

        # BN2 (+ shortcut BN) shift already combined; final tanh.
        # Dropout is identity in eval mode.
        o_ref[...] = jnp.tanh(out + sh_ref[:, 1:2]).astype(o_ref.dtype)

    full2d = lambda a: pl.BlockSpec(a.shape, lambda nb: (0, 0))
    in_specs = [pl.BlockSpec((pl.Squeezed(), in_rows, in_lanes), lambda nb: (nb, 0, 0)),
                full2d(w1f), full2d(w2f)]
    inputs = [xin, w1f, w2f]
    if use_res:
        in_specs.append(full2d(wsf))
        inputs.append(wsf)
    in_specs.append(full2d(shifts))
    inputs.append(shifts)

    out = pl.pallas_call(
        kernel,
        out_shape=jax.ShapeDtypeStruct((Nb, C_out, BL), jnp.float32),
        grid=(Nb,),
        in_specs=in_specs,
        out_specs=pl.BlockSpec((pl.Squeezed(), C_out, BL), lambda nb: (nb, 0, 0)),
        compiler_params=pltpu.CompilerParams(
            dimension_semantics=("parallel",),
            vmem_limit_bytes=int(min(64 << 20, max(32 << 20, 3 * step_bytes(B)))),
        ),
    )(*inputs)

    # Un-fold batch from the lane axis only when it was actually folded.
    if B > 1:
        out = out.reshape(Nb, C_out, B, L1).transpose(0, 2, 1, 3).reshape(Np, C_out, L1)
    else:
        out = out.reshape(Np, C_out, L1)
    return out[:N]


def residual_block_reference(x, params, *, kernel_size, stride, use_res):
    """Pure-JAX reference (eval-mode BN / dropout)."""
    pad = int(math.floor(kernel_size / 2))
    dn = ("NCH", "OIH", "NCH")

    def conv(x_, w, s, p):
        return jax.lax.conv_general_dilated(x_, w, (s,), [(p, p)],
                                            dimension_numbers=dn)

    def bn(x_, g, b, m, v):
        sc, sh = _fold_bn(g, b, m, v)
        return x_ * sc[None, :, :] + sh[None, :, :]

    h = conv(x, params["w1"], stride, pad)
    h = jnp.tanh(bn(h, params["g1"], params["b1"], params["m1"], params["v1"]))
    h = conv(h, params["w2"], 1, pad)
    h = bn(h, params["g2"], params["b2"], params["m2"], params["v2"])
    if use_res:
        sc = conv(x, params["ws"], stride, 0)
        sc = bn(sc, params["gs"], params["bs"], params["ms"], params["vs"])
        h = h + sc
    return jnp.tanh(h)


if __name__ == "__main__":
    # Small shapes consistent with the module's forward.
    N, C_IN, C_OUT, L = 2, 4, 8, 16
    KSIZE, STRIDE, USE_RES, DROPOUT = 3, 1, True, 0.5  # dropout inactive (eval)

    key = jax.random.PRNGKey(0)
    kx, kp = jax.random.split(key)
    x = jax.random.normal(kx, (N, C_IN, L), jnp.float32)
    params = make_params(kp, C_IN, C_OUT, KSIZE)

    fwd = functools.partial(residual_block_forward,
                            kernel_size=KSIZE, stride=STRIDE, use_res=USE_RES)
    out = jax.block_until_ready(fwd(x, params))

    ref = residual_block_reference(x, params, kernel_size=KSIZE,
                                   stride=STRIDE, use_res=USE_RES)
    assert out.shape == ref.shape, (out.shape, ref.shape)
    # bf16 MXU operands vs an all-f32 reference -> loosened tolerance.
    err = float(np.max(np.abs(np.asarray(out) - np.asarray(ref))))
    assert np.allclose(np.asarray(out), np.asarray(ref), atol=2e-2, rtol=2e-2), err
    print("KERNEL_OK")
</pallas_src>

<mosaic_0001>
module attributes {stable_mosaic.version = 11 : i64} {
  func.func @kernel(%arg0: i32, %arg1: memref<1x4x16xf32, #tpu.memory_space<vmem>>, %arg2: memref<8x12xbf16, #tpu.memory_space<vmem>>, %arg3: memref<8x24xbf16, #tpu.memory_space<vmem>>, %arg4: memref<8x4xbf16, #tpu.memory_space<vmem>>, %arg5: memref<8x2xf32, #tpu.memory_space<vmem>>, %arg6: memref<1x8x16xf32, #tpu.memory_space<vmem>>) attributes {dimension_semantics = [#tpu.dimension_semantics<parallel>], iteration_bounds = array<i64: 2>, scalar_prefetch = 0 : i64, scratch_operands = 0 : i64, tpu.core_type = #tpu.core_type<tc>, window_params = [{transform_indices = @transform_0, window_bounds = array<i64: 1, 4, 16>}, {pipeline_mode = #tpu.pipeline_mode<synchronous>, transform_indices = @transform_1, window_bounds = array<i64: 8, 12>}, {pipeline_mode = #tpu.pipeline_mode<synchronous>, transform_indices = @transform_2, window_bounds = array<i64: 8, 24>}, {pipeline_mode = #tpu.pipeline_mode<synchronous>, transform_indices = @transform_3, window_bounds = array<i64: 8, 4>}, {pipeline_mode = #tpu.pipeline_mode<synchronous>, transform_indices = @transform_4, window_bounds = array<i64: 8, 2>}, {transform_indices = @transform_5, window_bounds = array<i64: 1, 8, 16>}]} {
    %0 = tpu.iota {dimensions = array<i32: 1>} : vector<1x16xi32>
    %c16_i32 = arith.constant 16 : i32
    %c0_i32 = arith.constant 0 : i32
    %1 = arith.cmpi eq, %c16_i32, %c0_i32 : i32
    %c1_i32 = arith.constant 1 : i32
    %2 = arith.select %1, %c1_i32, %c16_i32 : i32
    %3 = vector.broadcast %2 : i32 to vector<1x16xi32>
    %4 = arith.remsi %0, %3 : vector<1x16xi32>
    %c0_i32_0 = arith.constant 0 : i32
    %5 = vector.broadcast %c0_i32_0 : i32 to vector<1x16xi32>
    %6 = arith.cmpi ne, %4, %5 : vector<1x16xi32>
    %c0_i32_1 = arith.constant 0 : i32
    %7 = vector.broadcast %c0_i32_1 : i32 to vector<1x16xi32>
    %8 = arith.cmpi slt, %4, %7 : vector<1x16xi32>
    %c0_i32_2 = arith.constant 0 : i32
    %9 = arith.cmpi slt, %2, %c0_i32_2 : i32
    %10 = vector.broadcast %9 : i1 to vector<1x16xi1>
    %11 = vector.broadcast %10 : vector<1x16xi1> to vector<1x16xi1>
    %12 = arith.xori %8, %11 : vector<1x16xi1>
    %13 = arith.andi %12, %6 : vector<1x16xi1>
    %14 = vector.broadcast %2 : i32 to vector<1x16xi32>
    %15 = arith.addi %4, %14 : vector<1x16xi32>
    %16 = arith.select %13, %15, %4 : vector<1x16xi1>, vector<1x16xi32>
    %c0 = arith.constant 0 : index
    %c0_3 = arith.constant 0 : index
    %c0_4 = arith.constant 0 : index
    %17 = vector.load %arg1[%c0, %c0_3, %c0_4] : memref<1x4x16xf32, #tpu.memory_space<vmem>>, vector<1x4x16xf32>
    %18 = vector.shape_cast %17 : vector<1x4x16xf32> to vector<4x16xf32>
    %cst = arith.constant 0.000000e+00 : f32
    %19 = vector.broadcast %cst : f32 to vector<4x1xf32>
    %20 = tpu.concatenate %19, %18, %19 in 1 : vector<4x1xf32>, vector<4x16xf32>, vector<4x1xf32> -> vector<4x18xf32>
    %21 = vector.extract_strided_slice %20 {offsets = [0, 0], sizes = [4, 16], strides = [1, 1]} : vector<4x18xf32> to vector<4x16xf32>
    %c-1_i32 = arith.constant -1 : i32
    %22 = vector.broadcast %c-1_i32 : i32 to vector<1x16xi32>
    %23 = arith.addi %16, %22 : vector<1x16xi32>
    %c0_i32_5 = arith.constant 0 : i32
    %24 = vector.broadcast %c0_i32_5 : i32 to vector<1x16xi32>
    %25 = arith.cmpi sge, %23, %24 : vector<1x16xi32>
    %c-1_i32_6 = arith.constant -1 : i32
    %26 = vector.broadcast %c-1_i32_6 : i32 to vector<1x16xi32>
    %27 = arith.addi %16, %26 : vector<1x16xi32>
    %c16_i32_7 = arith.constant 16 : i32
    %28 = vector.broadcast %c16_i32_7 : i32 to vector<1x16xi32>
    %29 = arith.cmpi slt, %27, %28 : vector<1x16xi32>
    %30 = arith.andi %25, %29 : vector<1x16xi1>
    %cst_8 = arith.constant 0.000000e+00 : f32
    %31 = vector.shape_cast %30 : vector<1x16xi1> to vector<1x16xi1>
    %32 = vector.broadcast %31 : vector<1x16xi1> to vector<4x16xi1>
    %33 = vector.broadcast %cst_8 : f32 to vector<4x16xf32>
    %34 = arith.select %32, %21, %33 : vector<4x16xi1>, vector<4x16xf32>
    %35 = vector.extract_strided_slice %20 {offsets = [0, 1], sizes = [4, 16], strides = [1, 1]} : vector<4x18xf32> to vector<4x16xf32>
    %c0_i32_9 = arith.constant 0 : i32
    %36 = vector.broadcast %c0_i32_9 : i32 to vector<1x16xi32>
    %37 = arith.addi %16, %36 : vector<1x16xi32>
    %c0_i32_10 = arith.constant 0 : i32
    %38 = vector.broadcast %c0_i32_10 : i32 to vector<1x16xi32>
    %39 = arith.cmpi sge, %37, %38 : vector<1x16xi32>
    %c0_i32_11 = arith.constant 0 : i32
    %40 = vector.broadcast %c0_i32_11 : i32 to vector<1x16xi32>
    %41 = arith.addi %16, %40 : vector<1x16xi32>
    %c16_i32_12 = arith.constant 16 : i32
    %42 = vector.broadcast %c16_i32_12 : i32 to vector<1x16xi32>
    %43 = arith.cmpi slt, %41, %42 : vector<1x16xi32>
    %44 = arith.andi %39, %43 : vector<1x16xi1>
    %cst_13 = arith.constant 0.000000e+00 : f32
    %45 = vector.shape_cast %44 : vector<1x16xi1> to vector<1x16xi1>
    %46 = vector.broadcast %45 : vector<1x16xi1> to vector<4x16xi1>
    %47 = vector.broadcast %cst_13 : f32 to vector<4x16xf32>
    %48 = arith.select %46, %35, %47 : vector<4x16xi1>, vector<4x16xf32>
    %49 = vector.extract_strided_slice %20 {offsets = [0, 2], sizes = [4, 16], strides = [1, 1]} : vector<4x18xf32> to vector<4x16xf32>
    %c1_i32_14 = arith.constant 1 : i32
    %50 = vector.broadcast %c1_i32_14 : i32 to vector<1x16xi32>
    %51 = arith.addi %16, %50 : vector<1x16xi32>
    %c0_i32_15 = arith.constant 0 : i32
    %52 = vector.broadcast %c0_i32_15 : i32 to vector<1x16xi32>
    %53 = arith.cmpi sge, %51, %52 : vector<1x16xi32>
    %c1_i32_16 = arith.constant 1 : i32
    %54 = vector.broadcast %c1_i32_16 : i32 to vector<1x16xi32>
    %55 = arith.addi %16, %54 : vector<1x16xi32>
    %c16_i32_17 = arith.constant 16 : i32
    %56 = vector.broadcast %c16_i32_17 : i32 to vector<1x16xi32>
    %57 = arith.cmpi slt, %55, %56 : vector<1x16xi32>
    %58 = arith.andi %53, %57 : vector<1x16xi1>
    %cst_18 = arith.constant 0.000000e+00 : f32
    %59 = vector.shape_cast %58 : vector<1x16xi1> to vector<1x16xi1>
    %60 = vector.broadcast %59 : vector<1x16xi1> to vector<4x16xi1>
    %61 = vector.broadcast %cst_18 : f32 to vector<4x16xf32>
    %62 = arith.select %60, %49, %61 : vector<4x16xi1>, vector<4x16xf32>
    %63 = tpu.concatenate %34, %48, %62 in 0 : vector<4x16xf32>, vector<4x16xf32>, vector<4x16xf32> -> vector<12x16xf32>
    %64 = arith.truncf %63 : vector<12x16xf32> to vector<12x16xbf16>
    %65 = arith.truncf %18 : vector<4x16xf32> to vector<4x16xbf16>
    %c0_19 = arith.constant 0 : index
    %c0_20 = arith.constant 0 : index
    %66 = vector.load %arg2[%c0_19, %c0_20] : memref<8x12xbf16, #tpu.memory_space<vmem>>, vector<8x12xbf16>
    %cst_21 = arith.constant dense<0.000000e+00> : vector<8x16xf32>
    %67 = tpu.matmul %66, %64, %cst_21 {dimension_numbers = #tpu.dot_dimension_numbers<[1], [0], [0], [1], [0, 0, 1, 1], [], []>} : vector<8x12xbf16>, vector<12x16xbf16>, vector<8x16xf32> -> vector<8x16xf32>
    %c0_22 = arith.constant 0 : index
    %c0_23 = arith.constant 0 : index
    %68 = vector.load %arg5[%c0_22, %c0_23] : memref<8x2xf32, #tpu.memory_space<vmem>>, vector<8x1xf32>
    %69 = vector.broadcast %68 : vector<8x1xf32> to vector<8x16xf32>
    %70 = arith.addf %67, %69 : vector<8x16xf32>
    %71 = math.tanh %70 : vector<8x16xf32>
    %cst_24 = arith.constant 0.000000e+00 : f32
    %72 = vector.broadcast %cst_24 : f32 to vector<8x1xf32>
    %73 = tpu.concatenate %72, %71, %72 in 1 : vector<8x1xf32>, vector<8x16xf32>, vector<8x1xf32> -> vector<8x18xf32>
    %74 = vector.extract_strided_slice %73 {offsets = [0, 0], sizes = [8, 16], strides = [1, 1]} : vector<8x18xf32> to vector<8x16xf32>
    %c-1_i32_25 = arith.constant -1 : i32
    %75 = vector.broadcast %c-1_i32_25 : i32 to vector<1x16xi32>
    %76 = arith.addi %16, %75 : vector<1x16xi32>
    %c0_i32_26 = arith.constant 0 : i32
    %77 = vector.broadcast %c0_i32_26 : i32 to vector<1x16xi32>
    %78 = arith.cmpi sge, %76, %77 : vector<1x16xi32>
    %c-1_i32_27 = arith.constant -1 : i32
    %79 = vector.broadcast %c-1_i32_27 : i32 to vector<1x16xi32>
    %80 = arith.addi %16, %79 : vector<1x16xi32>
    %c16_i32_28 = arith.constant 16 : i32
    %81 = vector.broadcast %c16_i32_28 : i32 to vector<1x16xi32>
    %82 = arith.cmpi slt, %80, %81 : vector<1x16xi32>
    %83 = arith.andi %78, %82 : vector<1x16xi1>
    %cst_29 = arith.constant 0.000000e+00 : f32
    %84 = vector.shape_cast %83 : vector<1x16xi1> to vector<1x16xi1>
    %85 = vector.broadcast %84 : vector<1x16xi1> to vector<8x16xi1>
    %86 = vector.broadcast %cst_29 : f32 to vector<8x16xf32>
    %87 = arith.select %85, %74, %86 : vector<8x16xi1>, vector<8x16xf32>
    %88 = vector.extract_strided_slice %73 {offsets = [0, 1], sizes = [8, 16], strides = [1, 1]} : vector<8x18xf32> to vector<8x16xf32>
    %c0_i32_30 = arith.constant 0 : i32
    %89 = vector.broadcast %c0_i32_30 : i32 to vector<1x16xi32>
    %90 = arith.addi %16, %89 : vector<1x16xi32>
    %c0_i32_31 = arith.constant 0 : i32
    %91 = vector.broadcast %c0_i32_31 : i32 to vector<1x16xi32>
    %92 = arith.cmpi sge, %90, %91 : vector<1x16xi32>
    %c0_i32_32 = arith.constant 0 : i32
    %93 = vector.broadcast %c0_i32_32 : i32 to vector<1x16xi32>
    %94 = arith.addi %16, %93 : vector<1x16xi32>
    %c16_i32_33 = arith.constant 16 : i32
    %95 = vector.broadcast %c16_i32_33 : i32 to vector<1x16xi32>
    %96 = arith.cmpi slt, %94, %95 : vector<1x16xi32>
    %97 = arith.andi %92, %96 : vector<1x16xi1>
    %cst_34 = arith.constant 0.000000e+00 : f32
    %98 = vector.shape_cast %97 : vector<1x16xi1> to vector<1x16xi1>
    %99 = vector.broadcast %98 : vector<1x16xi1> to vector<8x16xi1>
    %100 = vector.broadcast %cst_34 : f32 to vector<8x16xf32>
    %101 = arith.select %99, %88, %100 : vector<8x16xi1>, vector<8x16xf32>
    %102 = vector.extract_strided_slice %73 {offsets = [0, 2], sizes = [8, 16], strides = [1, 1]} : vector<8x18xf32> to vector<8x16xf32>
    %c1_i32_35 = arith.constant 1 : i32
    %103 = vector.broadcast %c1_i32_35 : i32 to vector<1x16xi32>
    %104 = arith.addi %16, %103 : vector<1x16xi32>
    %c0_i32_36 = arith.constant 0 : i32
    %105 = vector.broadcast %c0_i32_36 : i32 to vector<1x16xi32>
    %106 = arith.cmpi sge, %104, %105 : vector<1x16xi32>
    %c1_i32_37 = arith.constant 1 : i32
    %107 = vector.broadcast %c1_i32_37 : i32 to vector<1x16xi32>
    %108 = arith.addi %16, %107 : vector<1x16xi32>
    %c16_i32_38 = arith.constant 16 : i32
    %109 = vector.broadcast %c16_i32_38 : i32 to vector<1x16xi32>
    %110 = arith.cmpi slt, %108, %109 : vector<1x16xi32>
    %111 = arith.andi %106, %110 : vector<1x16xi1>
    %cst_39 = arith.constant 0.000000e+00 : f32
    %112 = vector.shape_cast %111 : vector<1x16xi1> to vector<1x16xi1>
    %113 = vector.broadcast %112 : vector<1x16xi1> to vector<8x16xi1>
    %114 = vector.broadcast %cst_39 : f32 to vector<8x16xf32>
    %115 = arith.select %113, %102, %114 : vector<8x16xi1>, vector<8x16xf32>
    %116 = tpu.concatenate %87, %101, %115 in 0 : vector<8x16xf32>, vector<8x16xf32>, vector<8x16xf32> -> vector<24x16xf32>
    %117 = arith.truncf %116 : vector<24x16xf32> to vector<24x16xbf16>
    %c0_40 = arith.constant 0 : index
    %c0_41 = arith.constant 0 : index
    %118 = vector.load %arg3[%c0_40, %c0_41] : memref<8x24xbf16, #tpu.memory_space<vmem>>, vector<8x24xbf16>
    %cst_42 = arith.constant dense<0.000000e+00> : vector<8x16xf32>
    %119 = tpu.matmul %118, %117, %cst_42 {dimension_numbers = #tpu.dot_dimension_numbers<[1], [0], [0], [1], [0, 0, 1, 1], [], []>} : vector<8x24xbf16>, vector<24x16xbf16>, vector<8x16xf32> -> vector<8x16xf32>
    %c0_43 = arith.constant 0 : index
    %c0_44 = arith.constant 0 : index
    %120 = vector.load %arg4[%c0_43, %c0_44] : memref<8x4xbf16, #tpu.memory_space<vmem>>, vector<8x4xbf16>
    %cst_45 = arith.constant dense<0.000000e+00> : vector<8x16xf32>
    %121 = tpu.matmul %120, %65, %cst_45 {dimension_numbers = #tpu.dot_dimension_numbers<[1], [0], [0], [1], [0, 0, 1, 1], [], []>} : vector<8x4xbf16>, vector<4x16xbf16>, vector<8x16xf32> -> vector<8x16xf32>
    %122 = arith.addf %119, %121 : vector<8x16xf32>
    %c0_46 = arith.constant 0 : index
    %c1 = arith.constant 1 : index
    %123 = vector.load %arg5[%c0_46, %c1] : memref<8x2xf32, #tpu.memory_space<vmem>>, vector<8x1xf32>
    %124 = vector.broadcast %123 : vector<8x1xf32> to vector<8x16xf32>
    %125 = arith.addf %122, %124 : vector<8x16xf32>
    %126 = math.tanh %125 : vector<8x16xf32>
    %c0_47 = arith.constant 0 : index
    %c0_48 = arith.constant 0 : index
    %c0_49 = arith.constant 0 : index
    %127 = vector.load %arg6[%c0_47, %c0_48, %c0_49] : memref<1x8x16xf32, #tpu.memory_space<vmem>>, vector<1x8x16xf32>
    %128 = vector.shape_cast %127 : vector<1x8x16xf32> to vector<8x16xf32>
    %129 = vector.shape_cast %126 : vector<8x16xf32> to vector<1x8x16xf32>
    tpu.vector_store %arg6[%c0_47, %c0_48, %c0_49], %129 {strides = array<i32>} : memref<1x8x16xf32, #tpu.memory_space<vmem>>, vector<1x8x16xf32>,
    return
  }
  func.func @transform_0(%arg0: i32) -> (i32, i32, i32) {
    %c0_i32 = arith.constant 0 : i32
    %c0_i32_0 = arith.constant 0 : i32
    %c0_i32_1 = arith.constant 0 : i32
    return %arg0, %c0_i32, %c0_i32_0 : i32, i32, i32
  }
  func.func @transform_1(%arg0: i32) -> (i32, i32) {
    %c0_i32 = arith.constant 0 : i32
    %c0_i32_0 = arith.constant 0 : i32
    %c0_i32_1 = arith.constant 0 : i32
    return %c0_i32, %c0_i32_0 : i32, i32
  }
  func.func @transform_2(%arg0: i32) -> (i32, i32) {
    %c0_i32 = arith.constant 0 : i32
    %c0_i32_0 = arith.constant 0 : i32
    %c0_i32_1 = arith.constant 0 : i32
    return %c0_i32, %c0_i32_0 : i32, i32
  }
  func.func @transform_3(%arg0: i32) -> (i32, i32) {
    %c0_i32 = arith.constant 0 : i32
    %c0_i32_0 = arith.constant 0 : i32
    %c0_i32_1 = arith.constant 0 : i32
    return %c0_i32, %c0_i32_0 : i32, i32
  }
  func.func @transform_4(%arg0: i32) -> (i32, i32) {
    %c0_i32 = arith.constant 0 : i32
    %c0_i32_0 = arith.constant 0 : i32
    %c0_i32_1 = arith.constant 0 : i32
    return %c0_i32, %c0_i32_0 : i32, i32
  }
  func.func @transform_5(%arg0: i32) -> (i32, i32, i32) {
    %c0_i32 = arith.constant 0 : i32
    %c0_i32_0 = arith.constant 0 : i32
    %c0_i32_1 = arith.constant 0 : i32
    return %arg0, %c0_i32, %c0_i32_0 : i32, i32, i32
  }
}

</mosaic_0001>

<llo_original>
// kernel: tpu_custom_call.1
$region0: #{tpu_custom_call.1}
  #allocation0 [shape = 'u32[]', space=smem, size = 0x4, offset = 0x4, fixed_abs, tag = 'smem constant byte address 0x4 - core index']
  #allocation1 [shape = 'u32[144,128]{1,0:T(1,128)}', space=vmem, size = 0x12000, scoped, tag = 'internal scratch']
  %s0 = inlined_call_operand.vmem [shape: f32[2,4,16], index: 0, kind: input, shape index: {}]
  %s1 = inlined_call_operand.vmem [shape: bf16[8,12], index: 1, kind: input, shape index: {}]
  %s2 = inlined_call_operand.vmem [shape: bf16[8,24], index: 2, kind: input, shape index: {}]
  %s3 = inlined_call_operand.vmem [shape: bf16[8,4], index: 3, kind: input, shape index: {}]
  %s4 = inlined_call_operand.vmem [shape: f32[8,2], index: 4, kind: input, shape index: {}]
  %s5 = inlined_call_operand.hbm [shape: f32[2,8,16], index: 5, kind: output, shape index: {}]
  %s6 = sld [smem:[#allocation0]]
  $region53: #{tpu_custom_call.1} parent=0
    _
  %s8 = ssub.s32 1, %s6
  %s9 = scalar_select 0, %s8, %s6
  $region1: #{tpu_custom_call.1} parent=0
    #allocation2 [shape = 'u8[8192]{0}', space=vmem, size = 0x2000, scoped, tag = 'output window, operand 0']
    #allocation3 [shape = 's32[2]{0}', space=sflag, size = 0x8, scoped, tag = 'scoped memory for tpu_custom_call.1']
    %10 = vsyncpa [#allocation3], 0
    %s11 = scalar_lea.sflag [#allocation3], 1
    %12 = vsyncpa %s11, 0
    loop: start=0, step=1, limit=4
    $region2: #{tpu_custom_call.1} parent=1 // loop_pre_header
      _
    $region3: #{tpu_custom_call.1} parent=1 // loop_header
      %s14 = sphi 0, %s18
      %p15 = scmp.ge.s32.totalorder %s14, 4
      %s24 = sphi 0, %s26
      %s27 = sphi 0, %s24
      %s28 = sphi 0, %s27
      %s44 = sphi 0, %s28
      %s48 = sphi 0, %s48
      %s50 = sphi 0, %s48
      %s51 = sphi 0, %s50
      %s65 = sphi 0, %s51
      %s69 = sphi 0, %s69
      %s71 = sphi 0, %s69
      %s72 = sphi 0, %s71
      %s86 = sphi 0, %s72
      %s90 = sphi 0, %s90
      %s92 = sphi 0, %s90
      %s93 = sphi 0, %s92
      %s107 = sphi 0, %s93
      %s111 = sphi 0, %s111
      %s113 = sphi 0, %s111
      %s114 = sphi 0, %s113
      %s128 = sphi 0, %s114
      %s134 = sphi 0, %s136
      %s137 = sphi 0, %s134
      %s138 = sphi 0, %s137
      %s154 = sphi 0, %s138
    $region4: #{tpu_custom_call.1} parent=1 // loop_header_branch
      %17 = sbr.rel (%p15) target = $region8
    $region5: #{tpu_custom_call.1} parent=1 // loop_body
      %s19 = ssub.s32 %s14, 1
      %s20 = ssub.s32 %s14, 2
      %s21 = sadd.s32 %s14, 1
      %s22 = ssub.s32 %s14, %s21
      %p23 = scmp.eq.s32.totalorder %s22, 0
      %s25 = sadd.s32 %s24, 1
      %s26 = scalar_select %p23, %s24, %s25
      %p29 = pneg %p23
      %p30 = scmp.eq.s32.totalorder %s14, 1
      %p31 = por %p29, %p30
      %p32 = scmp.ne.s32.totalorder %s24, %s27
      %p33 = scmp.eq.s32.totalorder %s14, 0
      %p34 = por %p32, %p33
      %p35 = scmp.ne.s32.totalorder %s24, %s27
      %p36 = scmp.eq.s32.totalorder %s19, 1
      %p37 = por %p35, %p36
      %p38 = scmp.ne.s32.totalorder %s27, %s28
      %p39 = scmp.eq.s32.totalorder %s19, 0
      %p40 = por %p38, %p39
      %p41 = scmp.ne.s32.totalorder %s27, %s28
      %p42 = scmp.eq.s32.totalorder %s20, 1
      %p43 = por %p41, %p42
      %p45 = scmp.ne.s32.totalorder %s28, %s44
      %p46 = scmp.eq.s32.totalorder %s20, 0
      %p47 = por %p45, %p46
      %s49 = sadd.s32 %s48, 1
      %p52 = scmp.eq.s32.totalorder %s14, 1
      %p53 = scmp.ne.s32.totalorder %s48, %s50
      %p54 = scmp.eq.s32.totalorder %s14, 0
      %p55 = por %p53, %p54
      %p56 = scmp.ne.s32.totalorder %s48, %s50
      %p57 = scmp.eq.s32.totalorder %s19, 1
      %p58 = por %p56, %p57
      %p59 = scmp.ne.s32.totalorder %s50, %s51
      %p60 = scmp.eq.s32.totalorder %s19, 0
      %p61 = por %p59, %p60
      %p62 = scmp.ne.s32.totalorder %s50, %s51
      %p63 = scmp.eq.s32.totalorder %s20, 1
      %p64 = por %p62, %p63
      %p66 = scmp.ne.s32.totalorder %s51, %s65
      %p67 = scmp.eq.s32.totalorder %s20, 0
      %p68 = por %p66, %p67
      %s70 = sadd.s32 %s69, 1
      %p73 = scmp.eq.s32.totalorder %s14, 1
      %p74 = scmp.ne.s32.totalorder %s69, %s71
      %p75 = scmp.eq.s32.totalorder %s14, 0
      %p76 = por %p74, %p75
      %p77 = scmp.ne.s32.totalorder %s69, %s71
      %p78 = scmp.eq.s32.totalorder %s19, 1
      %p79 = por %p77, %p78
      %p80 = scmp.ne.s32.totalorder %s71, %s72
      %p81 = scmp.eq.s32.totalorder %s19, 0
      %p82 = por %p80, %p81
      %p83 = scmp.ne.s32.totalorder %s71, %s72
      %p84 = scmp.eq.s32.totalorder %s20, 1
      %p85 = por %p83, %p84
      %p87 = scmp.ne.s32.totalorder %s72, %s86
      %p88 = scmp.eq.s32.totalorder %s20, 0
      %p89 = por %p87, %p88
      %s91 = sadd.s32 %s90, 1
      %p94 = scmp.eq.s32.totalorder %s14, 1
      %p95 = scmp.ne.s32.totalorder %s90, %s92
      %p96 = scmp.eq.s32.totalorder %s14, 0
      %p97 = por %p95, %p96
      %p98 = scmp.ne.s32.totalorder %s90, %s92
      %p99 = scmp.eq.s32.totalorder %s19, 1
      %p100 = por %p98, %p99
      %p101 = scmp.ne.s32.totalorder %s92, %s93
      %p102 = scmp.eq.s32.totalorder %s19, 0
      %p103 = por %p101, %p102
      %p104 = scmp.ne.s32.totalorder %s92, %s93
      %p105 = scmp.eq.s32.totalorder %s20, 1
      %p106 = por %p104, %p105
      %p108 = scmp.ne.s32.totalorder %s93, %s107
      %p109 = scmp.eq.s32.totalorder %s20, 0
      %p110 = por %p108, %p109
      %s112 = sadd.s32 %s111, 1
      %p115 = scmp.eq.s32.totalorder %s14, 1
      %p116 = scmp.ne.s32.totalorder %s111, %s113
      %p117 = scmp.eq.s32.totalorder %s14, 0
      %p118 = por %p116, %p117
      %p119 = scmp.ne.s32.totalorder %s111, %s113
      %p120 = scmp.eq.s32.totalorder %s19, 1
      %p121 = por %p119, %p120
      %p122 = scmp.ne.s32.totalorder %s113, %s114
      %p123 = scmp.eq.s32.totalorder %s19, 0
      %p124 = por %p122, %p123
      %p125 = scmp.ne.s32.totalorder %s113, %s114
      %p126 = scmp.eq.s32.totalorder %s20, 1
      %p127 = por %p125, %p126
      %p129 = scmp.ne.s32.totalorder %s114, %s128
      %p130 = scmp.eq.s32.totalorder %s20, 0
      %p131 = por %p129, %p130
      %s132 = ssub.s32 %s14, %s21
      %p133 = scmp.eq.s32.totalorder %s132, 0
      %s135 = sadd.s32 %s134, 1
      %s136 = scalar_select %p133, %s134, %s135
      %p139 = pneg %p133
      %p140 = scmp.eq.s32.totalorder %s14, 1
      %p141 = por %p139, %p140
      %p142 = scmp.ne.s32.totalorder %s134, %s137
      %p143 = scmp.eq.s32.totalorder %s14, 0
      %p144 = por %p142, %p143
      %p145 = scmp.ne.s32.totalorder %s134, %s137
      %p146 = scmp.eq.s32.totalorder %s19, 1
      %p147 = por %p145, %p146
      %p148 = scmp.ne.s32.totalorder %s137, %s138
      %p149 = scmp.eq.s32.totalorder %s19, 0
      %p150 = por %p148, %p149
      %p151 = scmp.ne.s32.totalorder %s137, %s138
      %p152 = scmp.eq.s32.totalorder %s20, 1
      %p153 = por %p151, %p152
      %p155 = scmp.ne.s32.totalorder %s138, %s154
      %p156 = scmp.eq.s32.totalorder %s20, 0
      %p157 = por %p155, %p156
      %p158 = scmp.le.s32.totalorder 1, %s14
      %p159 = scmp.lt.s32.totalorder %s14, 3
      %p160 = pnand %p158, %p159
      %p161 = pneg %p160
      // Predicated region
      $region9: #{tpu_custom_call.1} parent=5 // pred_check
        _
      $region10: #{tpu_custom_call.1} parent=5 // pred_check_branch
        %163 = sbr.rel (%p160) target = $region12
      $region11: #{tpu_custom_call.1} parent=5 // pred_region
        %s164 = ssub.s32 %s14, 1
        // Predicated region
        $region13: #{tpu_custom_call.1} parent=11 // pred_check
          %p165 = pneg %p61
        $region14: #{tpu_custom_call.1} parent=11 // pred_check_branch
          %167 = sbr.rel (%p165) target = $region16
        $region15: #{tpu_custom_call.1} parent=11 // pred_region
          _
        $region16: #{tpu_custom_call.1} parent=11 // pred_fallthru
          _
        // Predicated region
        $region17: #{tpu_custom_call.1} parent=11 // pred_check
          %p168 = pneg %p82
        $region18: #{tpu_custom_call.1} parent=11 // pred_check_branch
          %170 = sbr.rel (%p168) target = $region20
        $region19: #{tpu_custom_call.1} parent=11 // pred_region
          _
        $region20: #{tpu_custom_call.1} parent=11 // pred_fallthru
          _
        // Predicated region
        $region21: #{tpu_custom_call.1} parent=11 // pred_check
          %p171 = pneg %p103
        $region22: #{tpu_custom_call.1} parent=11 // pred_check_branch
          %173 = sbr.rel (%p171) target = $region24
        $region23: #{tpu_custom_call.1} parent=11 // pred_region
          _
        $region24: #{tpu_custom_call.1} parent=11 // pred_fallthru
          _
        // Predicated region
        $region25: #{tpu_custom_call.1} parent=11 // pred_check
          %p174 = pneg %p124
        $region26: #{tpu_custom_call.1} parent=11 // pred_check_branch
          %176 = sbr.rel (%p174) target = $region28
        $region27: #{tpu_custom_call.1} parent=11 // pred_region
          _
        $region28: #{tpu_custom_call.1} parent=11 // pred_fallthru
          _
      $region12: #{tpu_custom_call.1} parent=5 // pred_fallthru
        _
      %p177 = scmp.lt.s32.totalorder %s14, 2
      // Predicated region
      $region29: #{tpu_custom_call.1} parent=5 // pred_check
        %p178 = pneg %p177
      $region30: #{tpu_custom_call.1} parent=5 // pred_check_branch
        %180 = sbr.rel (%p178) target = $region32
      $region31: #{tpu_custom_call.1} parent=5 // pred_region
        // Predicated region
        $region33: #{tpu_custom_call.1} parent=31 // pred_check
          %p181 = pneg %p34
        $region34: #{tpu_custom_call.1} parent=31 // pred_check_branch
          %183 = sbr.rel (%p181) target = $region36
        $region35: #{tpu_custom_call.1} parent=31 // pred_region
          %p184 = scmp.lt.s32.totalorder %s14, 1
          %s185 = scalar_select %p184, %s14, 1
          %s186 = smul.addr %s185, 4
          %s187 = scalar_lea.vmem %s0, %s186
        $region36: #{tpu_custom_call.1} parent=31 // pred_fallthru
          _
      $region32: #{tpu_custom_call.1} parent=5 // pred_fallthru
        _
      %p188 = scmp.le.s32.totalorder 1, %s14
      %p189 = scmp.lt.s32.totalorder %s14, 3
      %p190 = pnand %p188, %p189
      %p191 = pneg %p190
      // Predicated region
      $region37: #{tpu_custom_call.1} parent=5 // pred_check
        _
      $region38: #{tpu_custom_call.1} parent=5 // pred_check_branch
        %193 = sbr.rel (%p190) target = $region40
      $region39: #{tpu_custom_call.1} parent=5 // pred_region
        %s194 = ssub.s32 %s14, 1
        %p195 = scmp.lt.s32.totalorder %s19, 1
        %s196 = scalar_select %p195, %s19, 1
        %s197 = smul.addr %s196, 4
        %s198 = scalar_lea.vmem %s0, %s197
        %p199 = pneg %p40
        %p200 = pneg %p37
        %p201 = pneg %p61
        %p202 = pneg %p58
        %p203 = pneg %p82
        %p204 = pneg %p79
        %p205 = pneg %p103
        %p206 = pneg %p100
        %p207 = pneg %p124
        %p208 = pneg %p121
        %p209 = pneg %p150
        %p210 = pneg %p147
        %s211 = sand.u32 %s137, 1
        %s212 = scalar_lea.sflag [#allocation3], %s211
        %s213 = sand.u32 %s137, 1
        %s214 = smul.addr %s213, 8
        %s215 = scalar_lea.vmem [#allocation2], %s214
        %p216 = scmp.lt.s32.totalorder %s19, 1
        %s217 = scalar_select %p216, %s19, 1
        %s218 = smul.addr %s217, 4
        %s219 = scalar_lea.vmem %s0, %s218
        %v221 = vlaneseq
        %v222 = vand.u32 %v221, 127
        %vm223 = vcmp.lt.s32.totalorder %v222, 0
        %v224 = vsub.s32 0, %v222
        %v225 = vsel %vm223, %v224, %v222
        %v226 = vshrl.u32 %v225, 4
        %v227 = vand.u32 %v225, 15
        %v228 = vsub.s32 0, %v227
        %v229 = vsel %vm223, %v228, %v227
        %vm230 = vcmp.ne.s32.totalorder %v229, 0
        %vm231 = vcmp.lt.s32.totalorder %v229, 0
        %vm232 = vmand %vm231, %vm230
        %v233 = vadd.s32 %v229, 16
        %v234 = vsel %vm232, %v233, %v229
        %v235 = vld [vmem:[%s219] sm:$0xf]
        %237 = vrot.lane.b32.xlu0 %v235, 1
        %v238 = vpop.permute.xlu0 %237
        %vm240 = vcmask 7168
        %v241 = vsel %vm240, 0.0, %v238
        %vm242 = vcmask 138240
        %v243 = vsel %vm242, %v241, 0.0
        %v244 = vadd.s32 %v234, 4294967295
        %vm245 = vcmp.ge.s32.totalorder %v244, 0
        %vm246 = vcmp.lt.s32.totalorder %v244, 16
        %vm247 = vmand %vm245, %vm246
        %v248 = vsel %vm247, 1, 0
        %vm249 = vcmp.eq.s32.totalorder %v248, 1
        %v250 = vsel %vm249, %v243, 0.0
        %vm251 = vcmp.ge.s32.totalorder %v234, 0
        %vm252 = vcmp.lt.s32.totalorder %v234, 16
        %vm253 = vmand %vm251, %vm252
        %v254 = vsel %vm253, 1, 0
        %vm255 = vcmp.eq.s32.totalorder %v254, 1
        %257 = vrot.lane.b32.xlu0 %v243, 127
        %v258 = vpop.permute.xlu0 %257
        %v260 = vsel %vm255, %v258, 0.0
        %v261 = vadd.s32 %v234, 1
        %vm262 = vcmp.ge.s32.totalorder %v261, 0
        %vm263 = vcmp.lt.s32.totalorder %v261, 16
        %vm264 = vmand %vm262, %vm263
        %v265 = vsel %vm264, 1, 0
        %vm266 = vcmp.eq.s32.totalorder %v265, 1
        %267 = vrot.lane.b32.xlu0 %v243, 126
        %v268 = vpop.permute.xlu0 %267
        %v270 = vsel %vm266, %v268, 0.0
        %v272 = vrot.slane %v260, 4
        %vm274 = vcmask 1043456
        %v275 = vsel %vm274, %v250, %v272
        %v276 = vpack.c.bf16 %v270, %v275
        %v277 = vpack.c.bf16 %v235, %v235
        %v278 = vld [vmem:[%s1] sm:$0xf]
        %v279 = vld [vmem:[%s4] sm:$0xff]
        %281 = vset.pattern.permute.xlu0 0
        %282 = vperm.xlu0 %281, %v279
        %v283 = vpop.permute.xlu0 %282
        %vm285 = vcmask 97280
        %v287 = vsel %vm285, %v278, 0
        %vm289 = vcmask 1045504
        %v291 = vsel %vm289, %v276, 0
        %293 = vmatprep.subr.bf16.mxu0 0
        %294 = vmatpush1.bf16.msra.mxu0 0
        %295 = vmatprep.subr.bf16.mxu0 0
        %296 = vmatpush1.bf16.msra.mxu0 0
        %297 = vmatprep.subr.bf16.mxu0 0
        %298 = vmatpush1.bf16.msra.mxu0 0
        %299 = vmatprep.subr.bf16.mxu0 0
        %300 = vmatpush1.bf16.msra.mxu0 0
        %301 = vmatprep.subr.bf16.mxu0 0
        %302 = vmatpush1.bf16.msra.mxu0 0
        %303 = vmatprep.subr.bf16.mxu0 0
        %304 = vmatpush1.bf16.msra.mxu0 0
        %305 = vmatprep.subr.bf16.mxu0 0
        %306 = vmatpush1.bf16.msra.mxu0 0
        %307 = vmatprep.subr.bf16.mxu0 0
        %308 = vmatpush1.bf16.msra.mxu0 %v291
        %309 = vmatprep.subr.bf16.mxu0 0
        %310 = vmatpush2.bf16.msra.mxu0 0
        %311 = vmatprep.subr.bf16.mxu0 0
        %312 = vmatpush2.bf16.msra.mxu0 0
        %313 = vmatprep.subr.bf16.mxu0 0
        %314 = vmatpush2.bf16.msra.mxu0 0
        %315 = vmatprep.subr.bf16.mxu0 0
        %316 = vmatpush2.bf16.msra.mxu0 0
        %317 = vmatprep.subr.bf16.mxu0 0
        %318 = vmatpush2.bf16.msra.mxu0 0
        %319 = vmatprep.subr.bf16.mxu0 0
        %320 = vmatpush2.bf16.msra.mxu0 0
        %321 = vmatprep.subr.bf16.mxu0 0
        %322 = vmatpush2.bf16.msra.mxu0 0
        %323 = vmatprep.subr.bf16.mxu0 0
        %324 = vmatpush2.bf16.msra.mxu0 0
        %325 = vmatprep.mubr.bf16.mxu0 0
        %326 = vmatmul.mubr.bf16.gmra.mxu0 %v287
        %v327 = vpop.f32.mrf.mxu0
        %v328 = vadd.f32 %v283, %v327
        %v329 = vpop.f32.mrf.mxu0
        %v330 = vpop.f32.mrf.mxu0
        %v331 = vpop.f32.mrf.mxu0
        %332 = vdwg.mxu0
        %v333 = vtanh.pop %v328
        %335 = vrot.lane.b32.xlu0 %v333, 1
        %v336 = vpop.permute.xlu0 %335
        %v338 = vsel %vm240, 0.0, %v336
        %v339 = vsel %vm242, %v338, 0.0
        %v340 = vsel %vm249, %v339, 0.0
        %342 = vrot.lane.b32.xlu0 %v339, 127
        %v343 = vpop.permute.xlu0 %342
        %v345 = vsel %vm255, %v343, 0.0
        %346 = vrot.lane.b32.xlu0 %v339, 126
        %v347 = vpop.permute.xlu0 %346
        %v349 = vsel %vm266, %v347, 0.0
        %v350 = vpack.c.bf16 %v345, %v340
        %v351 = vpack.c.bf16 %v349, %v349
        %v352 = vld [vmem:[%s2] sm:$0xf]
        %v353 = vld [vmem:[%s3] sm:$0xf]
        %vm354 = vcmask 31744
        %v356 = vsel %vm354, %v353, 0
        %vm358 = vcmask 1041408
        %v360 = vsel %vm358, %v277, 0
        %362 = vmatprep.subr.bf16.mxu0 0
        %363 = vmatpush1.bf16.msra.mxu0 0
        %364 = vmatprep.subr.bf16.mxu0 0
        %365 = vmatpush1.bf16.msra.mxu0 0
        %366 = vmatprep.subr.bf16.mxu0 0
        %367 = vmatpush1.bf16.msra.mxu0 0
        %368 = vmatprep.subr.bf16.mxu0 0
        %369 = vmatpush1.bf16.msra.mxu0 0
        %370 = vmatprep.subr.bf16.mxu0 0
        %371 = vmatpush1.bf16.msra.mxu0 0
        %372 = vmatprep.subr.bf16.mxu0 0
        %373 = vmatpush1.bf16.msra.mxu0 0
        %374 = vmatprep.subr.bf16.mxu0 0
        %375 = vmatpush1.bf16.msra.mxu0 0
        %376 = vmatprep.subr.bf16.mxu0 0
        %377 = vmatpush1.bf16.msra.mxu0 %v360
        %378 = vmatprep.subr.bf16.mxu0 0
        %379 = vmatpush2.bf16.msra.mxu0 0
        %380 = vmatprep.subr.bf16.mxu0 0
        %381 = vmatpush2.bf16.msra.mxu0 0
        %382 = vmatprep.subr.bf16.mxu0 0
        %383 = vmatpush2.bf16.msra.mxu0 0
        %384 = vmatprep.subr.bf16.mxu0 0
        %385 = vmatpush2.bf16.msra.mxu0 0
        %386 = vmatprep.subr.bf16.mxu0 0
        %387 = vmatpush2.bf16.msra.mxu0 0
        %388 = vmatprep.subr.bf16.mxu0 0
        %389 = vmatpush2.bf16.msra.mxu0 0
        %390 = vmatprep.subr.bf16.mxu0 0
        %391 = vmatpush2.bf16.msra.mxu0 0
        %392 = vmatprep.subr.bf16.mxu0 0
        %393 = vmatpush2.bf16.msra.mxu0 0
        %394 = vmatprep.mubr.bf16.mxu0 0
        %395 = vmatmul.mubr.bf16.gmra.mxu0 %v356
        %v396 = vpop.f32.mrf.mxu0
        %v397 = vadd.f32 0.0, %v396
        %v398 = vpop.f32.mrf.mxu0
        %v399 = vpop.f32.mrf.mxu0
        %v400 = vpop.f32.mrf.mxu0
        %401 = vdwg.mxu0
        %vm402 = vcmask 195584
        %v404 = vsel %vm402, %v352, 0
        %v407 = vsel %vm274, %v351, 0
        %409 = vmatprep.subr.bf16.mxu0 0
        %410 = vmatpush1.bf16.msra.mxu0 0
        %411 = vmatprep.subr.bf16.mxu0 0
        %412 = vmatpush1.bf16.msra.mxu0 0
        %413 = vmatprep.subr.bf16.mxu0 0
        %414 = vmatpush1.bf16.msra.mxu0 0
        %415 = vmatprep.subr.bf16.mxu0 0
        %416 = vmatpush1.bf16.msra.mxu0 0
        %417 = vmatprep.subr.bf16.mxu0 0
        %418 = vmatpush1.bf16.msra.mxu0 0
        %419 = vmatprep.subr.bf16.mxu0 0
        %420 = vmatpush1.bf16.msra.mxu0 0
        %421 = vmatprep.subr.bf16.mxu0 0
        %422 = vmatpush1.bf16.msra.mxu0 %v407
        %423 = vmatprep.subr.bf16.mxu0 0
        %424 = vmatpush1.bf16.msra.mxu0 %v350
        %425 = vmatprep.subr.bf16.mxu0 0
        %426 = vmatpush2.bf16.msra.mxu0 0
        %427 = vmatprep.subr.bf16.mxu0 0
        %428 = vmatpush2.bf16.msra.mxu0 0
        %429 = vmatprep.subr.bf16.mxu0 0
        %430 = vmatpush2.bf16.msra.mxu0 0
        %431 = vmatprep.subr.bf16.mxu0 0
        %432 = vmatpush2.bf16.msra.mxu0 0
        %433 = vmatprep.subr.bf16.mxu0 0
        %434 = vmatpush2.bf16.msra.mxu0 0
        %435 = vmatprep.subr.bf16.mxu0 0
        %436 = vmatpush2.bf16.msra.mxu0 0
        %437 = vmatprep.subr.bf16.mxu0 0
        %438 = vmatpush2.bf16.msra.mxu0 0
        %439 = vmatprep.subr.bf16.mxu0 0
        %440 = vmatpush2.bf16.msra.mxu0 0
        %441 = vmatprep.mubr.bf16.mxu0 0
        %442 = vmatmul.mubr.bf16.gmra.mxu0 %v404
        %v443 = vpop.f32.mrf.mxu0
        %v444 = vadd.f32 %v397, %v443
        %v445 = vpop.f32.mrf.mxu0
        %v446 = vpop.f32.mrf.mxu0
        %v447 = vpop.f32.mrf.mxu0
        %448 = vdwg.mxu0
        %449 = vset.pattern.permute.xlu0 1
        %450 = vperm.xlu0 %449, %v279
        %v451 = vpop.permute.xlu0 %450
        %v453 = vadd.f32 %v444, %v451
        %v454 = vtanh.pop %v453
        %vm455 = vcmask 130048
        %456 = vst.msk [vmem:[%s215] sm:$0xff] %vm455, %v454
        %s457 = sand.u32 %s137, 1
        %s458 = scalar_lea.sflag [#allocation3], %s457
        %s459 = sand.u32 %s137, 1
        %s460 = smul.addr %s459, 8
        %s461 = scalar_lea.vmem [#allocation2], %s460
        // Predicated region
        $region41: #{tpu_custom_call.1} parent=39 // pred_check
          %p462 = pneg %p147
        $region42: #{tpu_custom_call.1} parent=39 // pred_check_branch
          %464 = sbr.rel (%p462) target = $region44
        $region43: #{tpu_custom_call.1} parent=39 // pred_region
          %s466 = ssub.s32 128, 128
          %467 = vsyncadd %s458, %s466
          %s468 = smul.addr %s19, 128
          %s469 = scalar_lea.hbm %s5, %s468
          %s471 = sshll.u32 %s461, 4
          %s472 = int_to_ptr.vmem [resolvable:$true] %s471
          %474 = dma.vmem_to_hbm [thread:$0]  %s472, 128, %s469, %s458
        $region44: #{tpu_custom_call.1} parent=39 // pred_fallthru
          _
      $region40: #{tpu_custom_call.1} parent=5 // pred_fallthru
        _
      %p475 = scmp.le.s32.totalorder 2, %s14
      // Predicated region
      $region45: #{tpu_custom_call.1} parent=5 // pred_check
        %p476 = pneg %p475
      $region46: #{tpu_custom_call.1} parent=5 // pred_check_branch
        %478 = sbr.rel (%p476) target = $region48
      $region47: #{tpu_custom_call.1} parent=5 // pred_region
        %s479 = ssub.s32 %s14, 2
        // Predicated region
        $region49: #{tpu_custom_call.1} parent=47 // pred_check
          %p480 = pneg %p153
        $region50: #{tpu_custom_call.1} parent=47 // pred_check_branch
          %482 = sbr.rel (%p480) target = $region52
        $region51: #{tpu_custom_call.1} parent=47 // pred_region
          %s483 = sand.u32 %s138, 1
          %s484 = scalar_lea.sflag [#allocation3], %s483
          %s485 = sand.u32 %s138, 1
          %s486 = smul.addr %s485, 8
          %s487 = scalar_lea.vmem [#allocation2], %s486
          %488 = dma.done %s484, 128
        $region52: #{tpu_custom_call.1} parent=47 // pred_fallthru
          _
      $region48: #{tpu_custom_call.1} parent=5 // pred_fallthru
        _
    $region6: #{tpu_custom_call.1} parent=1 // loop_footer
      %s18 = sadd.s32 1, %s14
    $region7: #{tpu_custom_call.1} parent=1 // loop_footer_branch
      %13 = sbr.rel target = $region3
    $region8: #{tpu_custom_call.1} parent=1 // loop_exit
      _
    %489 = vsyncpa [#allocation3], 1
    %s490 = scalar_lea.sflag [#allocation3], 1
    %491 = vsyncpa %s490, 1

</llo_original>
